<compile_context>
chip_gen: v6e
topology: v6e:2x2x1
jax: 0.10.0
libtpu: 0.0.40
codegen_flags: <defaults>
</compile_context>

<pallas_src>
import jax
import jax.numpy as jnp
from jax import lax
from jax.experimental import pallas as pl
from jax.experimental.pallas import tpu as pltpu


_VMEM_LIMIT_BYTES = 48 * 1024 * 1024   # scoped VMEM: safe on v7x (64 MiB phys)
_TILE_VMEM_BUDGET = 36 * 1024 * 1024   # streamed + resident blocks, with headroom


# --------------------------------------------------------------------------- #
# Kernels
# --------------------------------------------------------------------------- #
def _layer1_kernel(a_ref, lin1_ref, x_ref, deg_ref, w23_ref, b23_ref, h1_ref):
    """LEConv + relu for one row tile.

    a_ref:    (tm, N)  bf16 0/1 adjacency rows (messages j -> i)
    lin1_ref: (N, dim) bf16, precomputed x @ W1 + b1 (resident full block)
    x_ref:    (tm, F)  f32 rows of this tile (for the fused lin2|lin3 proj)
    """
    f32 = jnp.float32
    dim = h1_ref.shape[1]

    neigh = jnp.dot(a_ref[...], lin1_ref[...], preferred_element_type=f32)
    proj = jnp.dot(x_ref[...], w23_ref[...], preferred_element_type=f32) + b23_ref[...]
    lin2 = proj[:, :dim]          # no bias
    lin3 = proj[:, dim:]          # bias folded into b23
    h1 = jnp.maximum(neigh - deg_ref[...] * lin2 + lin3, 0.0)
    h1_ref[...] = h1.astype(h1_ref.dtype)


def _layer2_kernel(a_ref, h1all_ref, h1t_ref, invdeg_ref, selfc_ref,
                   wcat_ref, bout_ref, h3_ref):
    """ClusterGCNConv + relu for one row tile.

    (A_noself + I) @ h1, row-normalized:  invdeg*(A@h1) + selfc*h1_tile,
    with selfc = (1 - selfcount)/deg precomputed host-side.
    Output projection fused: [agg | h1_tile] @ [W_out; W_root] + b_out.
    """
    f32 = jnp.float32
    h1_tile = h1t_ref[...].astype(f32)                                   # (tm, dim)
    agg = jnp.dot(a_ref[...], h1all_ref[...], preferred_element_type=f32)  # bf16 x bf16
    agg = invdeg_ref[...] * agg + selfc_ref[...] * h1_tile
    hcat = jnp.concatenate([agg, h1_tile], axis=-1)                      # (tm, 2*dim)
    h3_ref[...] = jnp.maximum(
        jnp.dot(hcat, wcat_ref[...], preferred_element_type=f32) + bout_ref[...], 0.0)


def _head_kernel(poolt_ref, h3_ref, wfc1_ref, bfc1_ref, wfc2_ref, bfc2_ref,
                 out_ref, acc_ref):
    """global_mean_pool (tiled over nodes, accumulator) + fc1/relu + fc2."""
    f32 = jnp.float32

    @pl.when(pl.program_id(0) == 0)
    def _():
        acc_ref[...] = jnp.zeros_like(acc_ref)

    # pool^T tile: (tm, G); h3 tile: (tm, dim); contract over the node axis.
    acc_ref[...] += lax.dot_general(
        poolt_ref[...], h3_ref[...],
        dimension_numbers=(((0,), (0,)), ((), ())),
        preferred_element_type=f32)

    @pl.when(pl.program_id(0) == pl.num_programs(0) - 1)
    def _():
        h4 = jnp.maximum(
            jnp.dot(acc_ref[...], wfc1_ref[...], preferred_element_type=f32)
            + bfc1_ref[...], 0.0)
        out_ref[...] = (jnp.dot(h4, wfc2_ref[...], preferred_element_type=f32)
                        + bfc2_ref[...])


# --------------------------------------------------------------------------- #
# Graph densification glue (plain JAX, not the hot path)
# --------------------------------------------------------------------------- #
def build_graph_tensors(edge_index, batch, num_nodes, num_graphs, n_pad):
    """Shared 0/1 adjacency (bf16, exact for multiplicities <= 256) + per-node
    degree vectors (f32) + transposed mean-pool matrix (n_pad, G)."""
    f32 = jnp.float32
    src, dst = edge_index[0], edge_index[1]
    # Row i = target, col j = source (messages flow j -> i).  Padded rows/cols = 0.
    adj = jnp.zeros((n_pad, n_pad), f32).at[dst, src].add(1.0)
    deg1 = adj.sum(axis=1, keepdims=True)                        # in-degree (LEConv)
    selfcount = jnp.diagonal(adj)[:, None]                       # existing self loops
    invdeg2 = 1.0 / jnp.maximum(deg1 - selfcount + 1.0, 1.0)     # ClusterGCN row norm
    selfc = (1.0 - selfcount) * invdeg2                          # folded (-self + I)/deg

    onehot = (batch[None, :] == jnp.arange(num_graphs)[:, None]).astype(f32)
    pool = onehot / jnp.maximum(onehot.sum(axis=1, keepdims=True), 1.0)
    pool_t = jnp.pad(pool, ((0, 0), (0, n_pad - num_nodes))).T   # (n_pad, G)
    return adj.astype(jnp.bfloat16), deg1, invdeg2, selfc, pool_t


def _pick_tile_rows(num_nodes, dim, requested=None):
    """Row-tile size for the adjacency stream.

    Budget: double-buffered bf16 adjacency rows + the resident (double-buffered)
    bf16 lin1/h1 full block, within _TILE_VMEM_BUDGET.  Rounded to 16 (bf16
    sublane packing); capped so >= ~4 row tiles exist (v7x megacore balance).
    """
    if requested is not None:
        tm = int(requested)
    else:
        n = max(num_nodes, 1)
        resident = 4 * n * dim                      # bf16 full block, 2 buffers
        avail = max(_TILE_VMEM_BUDGET - resident, 1 << 20)
        tm = avail // (2 * 2 * n)                   # 2 buffers x bf16 rows
        tm = max(16, min(512, (tm // 16) * 16))
        quarter = max(16, (-(-n // 4) + 15) // 16 * 16)
        tm = min(tm, quarter)
    assert tm % 16 == 0 and tm >= 16, "row tile must be a multiple of 16"
    return tm


# --------------------------------------------------------------------------- #
# Forward wrapper
# --------------------------------------------------------------------------- #
def le_cluster_gcn_forward(x, edge_index, batch, params, num_graphs,
                           tile_rows=None):
    f32, bf16 = jnp.float32, jnp.bfloat16
    n_nodes, n_feat = x.shape
    dim = params["w1"].shape[0]
    n_cls = params["wfc2"].shape[0]
    CPAD = 128                                   # lane-dense fc2 output, sliced after

    tm = _pick_tile_rows(n_nodes, dim, tile_rows)
    n_pad = pl.cdiv(n_nodes, tm) * tm
    n_tiles = n_pad // tm

    adj_bf16, deg1, invdeg2, selfc, pool_t = build_graph_tensors(
        edge_index, batch, n_nodes, num_graphs, n_pad)
    x_pad = jnp.pad(x.astype(f32), ((0, n_pad - n_nodes), (0, 0)))

    # Weights pre-transposed to [in, out]; biases as [1, out].
    w1, w2, w3 = params["w1"].T, params["w2"].T, params["w3"].T
    b1, b3 = params["b1"][None, :], params["b3"][None, :]
    # lin1 precomputed ONCE (plain XLA), handed to layer 1 as a resident bf16 block.
    lin1_bf16 = (x_pad @ w1 + b1).astype(bf16)
    # Fused lin2|lin3 projection (lin2 has no bias).
    w23 = jnp.concatenate([w2, w3], axis=1)                          # (F, 2*dim)
    b23 = jnp.concatenate([jnp.zeros((1, dim), f32), b3], axis=1)    # (1, 2*dim)
    # Fused layer-2 output projection [W_out; W_root] (root has no bias).
    wcat = jnp.concatenate([params["wout"].T, params["wroot"].T], axis=0)  # (2*dim, dim)
    bout = params["bout"][None, :]
    wfc1, bfc1 = params["wfc1"].T, params["bfc1"][None, :]
    wfc2 = jnp.zeros((dim, CPAD), f32).at[:, :n_cls].set(params["wfc2"].T)
    bfc2 = jnp.zeros((1, CPAD), f32).at[:, :n_cls].set(params["bfc2"][None, :])

    cp_layers = pltpu.CompilerParams(dimension_semantics=("parallel",),
                                     vmem_limit_bytes=_VMEM_LIMIT_BYTES)
    cp_head = pltpu.CompilerParams(dimension_semantics=("arbitrary",),
                                   vmem_limit_bytes=_VMEM_LIMIT_BYTES)

    # ---- layer 1: LEConv + relu ---------------------------------------------
    cost1 = pl.CostEstimate(
        flops=2 * n_pad * n_pad * dim + 4 * n_pad * n_feat * dim,
        transcendentals=0,
        bytes_accessed=(n_pad * n_pad * 2 + n_pad * dim * 2
                        + n_pad * n_feat * 4 + n_pad * 4 + n_pad * dim * 2))
    h1 = pl.pallas_call(
        _layer1_kernel,
        out_shape=jax.ShapeDtypeStruct((n_pad, dim), bf16),
        grid_spec=pltpu.PrefetchScalarGridSpec(
            num_scalar_prefetch=0,
            grid=(n_tiles,),
            in_specs=[
                pl.BlockSpec((tm, n_pad), lambda i: (i, 0)),        # bf16 adjacency rows
                pl.BlockSpec((n_pad, dim), lambda i: (0, 0)),       # lin1 (bf16, resident)
                pl.BlockSpec((tm, n_feat), lambda i: (i, 0)),       # x rows of this tile
                pl.BlockSpec((tm, 1), lambda i: (i, 0)),            # in-degree
                pl.BlockSpec((n_feat, 2 * dim), lambda i: (0, 0)),  # [W2 | W3]
                pl.BlockSpec((1, 2 * dim), lambda i: (0, 0)),       # [0 | b3]
            ],
            out_specs=pl.BlockSpec((tm, dim), lambda i: (i, 0)),
        ),
        compiler_params=cp_layers,
        cost_estimate=cost1,
    )(adj_bf16, lin1_bf16, x_pad, deg1, w23, b23)

    # ---- layer 2: ClusterGCNConv + relu --------------------------------------
    cost2 = pl.CostEstimate(
        flops=2 * n_pad * n_pad * dim + 4 * n_pad * dim * dim,
        transcendentals=0,
        bytes_accessed=(n_pad * n_pad * 2 + 2 * n_pad * dim * 2
                        + n_pad * 8 + n_pad * dim * 4))
    h3 = pl.pallas_call(
        _layer2_kernel,
        out_shape=jax.ShapeDtypeStruct((n_pad, dim), f32),
        grid_spec=pltpu.PrefetchScalarGridSpec(
            num_scalar_prefetch=0,
            grid=(n_tiles,),
            in_specs=[
                pl.BlockSpec((tm, n_pad), lambda i: (i, 0)),    # bf16 adjacency rows
                pl.BlockSpec((n_pad, dim), lambda i: (0, 0)),   # h1 full (bf16, resident)
                pl.BlockSpec((tm, dim), lambda i: (i, 0)),      # h1 rows of this tile
                pl.BlockSpec((tm, 1), lambda i: (i, 0)),        # 1 / deg(A_noself + I)
                pl.BlockSpec((tm, 1), lambda i: (i, 0)),        # (1 - selfcount) / deg
                pl.BlockSpec((2 * dim, dim), lambda i: (0, 0)), # [W_out ; W_root]
                pl.BlockSpec((1, dim), lambda i: (0, 0)),       # b_out
            ],
            out_specs=pl.BlockSpec((tm, dim), lambda i: (i, 0)),
        ),
        compiler_params=cp_layers,
        cost_estimate=cost2,
    )(adj_bf16, h1, h1, invdeg2, selfc, wcat, bout)

    # ---- head: global_mean_pool (node-tiled, accumulator) + fc1/relu + fc2 ---
    cost3 = pl.CostEstimate(
        flops=(2 * n_pad * num_graphs * dim + 2 * num_graphs * dim * dim
               + 2 * num_graphs * dim * CPAD),
        transcendentals=0,
        bytes_accessed=n_pad * (dim + num_graphs) * 4 + num_graphs * CPAD * 4)
    out_pad = pl.pallas_call(
        _head_kernel,
        out_shape=jax.ShapeDtypeStruct((num_graphs, CPAD), f32),
        grid_spec=pltpu.PrefetchScalarGridSpec(
            num_scalar_prefetch=0,
            grid=(n_tiles,),
            in_specs=[
                pl.BlockSpec((tm, num_graphs), lambda i: (i, 0)),  # pool^T rows
                pl.BlockSpec((tm, dim), lambda i: (i, 0)),         # h3 rows
                pl.BlockSpec((dim, dim), lambda i: (0, 0)),        # W_fc1
                pl.BlockSpec((1, dim), lambda i: (0, 0)),          # b_fc1
                pl.BlockSpec((dim, CPAD), lambda i: (0, 0)),       # W_fc2 (lane-padded)
                pl.BlockSpec((1, CPAD), lambda i: (0, 0)),         # b_fc2 (lane-padded)
            ],
            out_specs=pl.BlockSpec((num_graphs, CPAD), lambda i: (0, 0)),
            scratch_shapes=[pltpu.VMEM((num_graphs, dim), f32)],
        ),
        compiler_params=cp_head,
        cost_estimate=cost3,
    )(pool_t, h3, wfc1, bfc1, wfc2, bfc2)

    return out_pad[:, :n_cls]


# --------------------------------------------------------------------------- #
# Pure-JAX reference & params
# --------------------------------------------------------------------------- #
def reference_forward(x, edge_index, batch, params, num_graphs):
    f32 = jnp.float32
    n = x.shape[0]
    src, dst = edge_index[0], edge_index[1]
    adj1 = jnp.zeros((n, n), f32).at[dst, src].add(1.0)
    deg1 = adj1.sum(axis=1, keepdims=True)
    non_self = (src != dst).astype(f32)
    a2 = jnp.zeros((n, n), f32).at[dst, src].add(non_self) + jnp.eye(n, dtype=f32)
    adj2 = a2 / jnp.maximum(a2.sum(axis=1, keepdims=True), 1.0)
    onehot = (batch[None, :] == jnp.arange(num_graphs)[:, None]).astype(f32)
    pool = onehot / jnp.maximum(onehot.sum(axis=1, keepdims=True), 1.0)

    a = x @ params["w1"].T + params["b1"]
    b = x @ params["w2"].T
    c = x @ params["w3"].T + params["b3"]
    h1 = jnp.maximum(adj1 @ a - deg1 * b + c, 0.0)
    h2 = (adj2 @ h1) @ params["wout"].T + params["bout"] + h1 @ params["wroot"].T
    h3 = jnp.maximum(h2, 0.0)
    h4 = pool @ h3
    h4 = jnp.maximum(h4 @ params["wfc1"].T + params["bfc1"], 0.0)
    return h4 @ params["wfc2"].T + params["bfc2"]


def init_params(key, num_features, dim, num_classes):
    ks = jax.random.split(key, 12)
    s = 0.1
    return {
        "w1":    s * jax.random.normal(ks[0], (dim, num_features), jnp.float32),
        "b1":    s * jax.random.normal(ks[1], (dim,), jnp.float32),
        "w2":    s * jax.random.normal(ks[2], (dim, num_features), jnp.float32),
        "w3":    s * jax.random.normal(ks[3], (dim, num_features), jnp.float32),
        "b3":    s * jax.random.normal(ks[4], (dim,), jnp.float32),
        "wout":  s * jax.random.normal(ks[5], (dim, dim), jnp.float32),
        "bout":  s * jax.random.normal(ks[6], (dim,), jnp.float32),
        "wroot": s * jax.random.normal(ks[7], (dim, dim), jnp.float32),
        "wfc1":  s * jax.random.normal(ks[8], (dim, dim), jnp.float32),
        "bfc1":  s * jax.random.normal(ks[9], (dim,), jnp.float32),
        "wfc2":  s * jax.random.normal(ks[10], (num_classes, dim), jnp.float32),
        "bfc2":  s * jax.random.normal(ks[11], (num_classes,), jnp.float32),
    }


if __name__ == "__main__":
    key = jax.random.PRNGKey(0)
    NUM_FEATURES, DIM, NUM_CLASSES = 8, 32, 4
    graph_sizes = [8, 8, 5]            # two 8-node rings + one 5-node path
    NUM_GRAPHS = len(graph_sizes)
    N = sum(graph_sizes)

    k_x, k_p = jax.random.split(key)
    x = jax.random.normal(k_x, (N, NUM_FEATURES), jnp.float32)
    params = init_params(k_p, NUM_FEATURES, DIM, NUM_CLASSES)

    src_list, dst_list, batch_list = [], [], []
    off = 0
    for g, n_g in enumerate(graph_sizes):
        for i in range(n_g):
            j = (i + 1) % n_g
            if g < 2 or j != 0:        # rings for the first two graphs, path for the third
                src_list += [off + i, off + j]
                dst_list += [off + j, off + i]
        batch_list += [g] * n_g
        off += n_g
    src_list.append(3)                 # one explicit self loop (kept by LEConv,
    dst_list.append(3)                 #  removed/re-added inside ClusterGCNConv)
    edge_index = jnp.array([src_list, dst_list], dtype=jnp.int32)
    batch = jnp.array(batch_list, dtype=jnp.int32)

    # Auto tile picker gives tm=16 for this tiny graph (N=21 -> padded to 32 ->
    # 2 row tiles), so the multi-tile grid + head accumulator are exercised.
    out = le_cluster_gcn_forward(x, edge_index, batch, params, NUM_GRAPHS)
    out = jax.block_until_ready(out)
    ref = reference_forward(x, edge_index, batch, params, NUM_GRAPHS)

    assert out.shape == (NUM_GRAPHS, NUM_CLASSES)
    # bf16 adjacency / lin1 / h1 operands in the MXU dots -> ~1e-3-level noise.
    assert jnp.allclose(out, ref, atol=2e-2, rtol=2e-2), (out, ref)
    print("KERNEL_OK")
</pallas_src>

<mosaic_0001>
module attributes {stable_mosaic.version = 11 : i64} {
  func.func @_layer1_kernel(%arg0: i32, %arg1: memref<16x32xbf16, #tpu.memory_space<vmem>>, %arg2: memref<32x32xbf16, #tpu.memory_space<vmem>>, %arg3: memref<16x8xf32, #tpu.memory_space<vmem>>, %arg4: memref<16x1xf32, #tpu.memory_space<vmem>>, %arg5: memref<8x64xf32, #tpu.memory_space<vmem>>, %arg6: memref<1x64xf32, #tpu.memory_space<vmem>>, %arg7: memref<16x32xbf16, #tpu.memory_space<vmem>>) attributes {dimension_semantics = [#tpu.dimension_semantics<parallel>], iteration_bounds = array<i64: 2>, scalar_prefetch = 0 : i64, scratch_operands = 0 : i64, tpu.core_type = #tpu.core_type<tc>, window_params = [{transform_indices = @transform_0, window_bounds = array<i64: 16, 32>}, {pipeline_mode = #tpu.pipeline_mode<synchronous>, transform_indices = @transform_1, window_bounds = array<i64: 32, 32>}, {transform_indices = @transform_2, window_bounds = array<i64: 16, 8>}, {transform_indices = @transform_3, window_bounds = array<i64: 16, 1>}, {pipeline_mode = #tpu.pipeline_mode<synchronous>, transform_indices = @transform_4, window_bounds = array<i64: 8, 64>}, {pipeline_mode = #tpu.pipeline_mode<synchronous>, transform_indices = @transform_5, window_bounds = array<i64: 1, 64>}, {transform_indices = @transform_6, window_bounds = array<i64: 16, 32>}]} {
    %c0 = arith.constant 0 : index
    %c0_0 = arith.constant 0 : index
    %0 = vector.load %arg1[%c0, %c0_0] : memref<16x32xbf16, #tpu.memory_space<vmem>>, vector<16x32xbf16>
    %c0_1 = arith.constant 0 : index
    %c0_2 = arith.constant 0 : index
    %1 = vector.load %arg2[%c0_1, %c0_2] : memref<32x32xbf16, #tpu.memory_space<vmem>>, vector<32x32xbf16>
    %cst = arith.constant dense<0.000000e+00> : vector<16x32xf32>
    %2 = tpu.matmul %0, %1, %cst {dimension_numbers = #tpu.dot_dimension_numbers<[1], [0], [0], [1], [0, 0, 1, 1], [], []>} : vector<16x32xbf16>, vector<32x32xbf16>, vector<16x32xf32> -> vector<16x32xf32>
    %c0_3 = arith.constant 0 : index
    %c0_4 = arith.constant 0 : index
    %3 = vector.load %arg3[%c0_3, %c0_4] : memref<16x8xf32, #tpu.memory_space<vmem>>, vector<16x8xf32>
    %c0_5 = arith.constant 0 : index
    %c0_6 = arith.constant 0 : index
    %4 = vector.load %arg5[%c0_5, %c0_6] : memref<8x64xf32, #tpu.memory_space<vmem>>, vector<8x64xf32>
    %cst_7 = arith.constant dense<0.000000e+00> : vector<16x64xf32>
    %5 = tpu.matmul %3, %4, %cst_7 {dimension_numbers = #tpu.dot_dimension_numbers<[1], [0], [0], [1], [0, 0, 1, 1], [], []>} : vector<16x8xf32>, vector<8x64xf32>, vector<16x64xf32> -> vector<16x64xf32>
    %c0_8 = arith.constant 0 : index
    %c0_9 = arith.constant 0 : index
    %6 = vector.load %arg6[%c0_8, %c0_9] : memref<1x64xf32, #tpu.memory_space<vmem>>, vector<1x64xf32>
    %7 = vector.broadcast %6 : vector<1x64xf32> to vector<16x64xf32>
    %8 = arith.addf %5, %7 : vector<16x64xf32>
    %9 = vector.extract_strided_slice %8 {offsets = [0, 0], sizes = [16, 32], strides = [1, 1]} : vector<16x64xf32> to vector<16x32xf32>
    %10 = vector.extract_strided_slice %8 {offsets = [0, 32], sizes = [16, 32], strides = [1, 1]} : vector<16x64xf32> to vector<16x32xf32>
    %c0_10 = arith.constant 0 : index
    %c0_11 = arith.constant 0 : index
    %11 = vector.load %arg4[%c0_10, %c0_11] : memref<16x1xf32, #tpu.memory_space<vmem>>, vector<16x1xf32>
    %12 = vector.broadcast %11 : vector<16x1xf32> to vector<16x32xf32>
    %13 = arith.mulf %12, %9 : vector<16x32xf32>
    %14 = arith.subf %2, %13 : vector<16x32xf32>
    %15 = arith.addf %14, %10 : vector<16x32xf32>
    %cst_12 = arith.constant 0.000000e+00 : f32
    %16 = vector.broadcast %cst_12 : f32 to vector<16x32xf32>
    %17 = arith.maximumf %15, %16 : vector<16x32xf32>
    %18 = arith.truncf %17 : vector<16x32xf32> to vector<16x32xbf16>
    %c0_13 = arith.constant 0 : index
    %c0_14 = arith.constant 0 : index
    %19 = vector.load %arg7[%c0_13, %c0_14] : memref<16x32xbf16, #tpu.memory_space<vmem>>, vector<16x32xbf16>
    tpu.vector_store %arg7[%c0_13, %c0_14], %18 {strides = array<i32>} : memref<16x32xbf16, #tpu.memory_space<vmem>>, vector<16x32xbf16>,
    return
  }
  func.func @transform_0(%arg0: i32) -> (i32, i32) {
    %c0_i32 = arith.constant 0 : i32
    %c0_i32_0 = arith.constant 0 : i32
    return %arg0, %c0_i32 : i32, i32
  }
  func.func @transform_1(%arg0: i32) -> (i32, i32) {
    %c0_i32 = arith.constant 0 : i32
    %c0_i32_0 = arith.constant 0 : i32
    %c0_i32_1 = arith.constant 0 : i32
    return %c0_i32, %c0_i32_0 : i32, i32
  }
  func.func @transform_2(%arg0: i32) -> (i32, i32) {
    %c0_i32 = arith.constant 0 : i32
    %c0_i32_0 = arith.constant 0 : i32
    return %arg0, %c0_i32 : i32, i32
  }
  func.func @transform_3(%arg0: i32) -> (i32, i32) {
    %c0_i32 = arith.constant 0 : i32
    %c0_i32_0 = arith.constant 0 : i32
    return %arg0, %c0_i32 : i32, i32
  }
  func.func @transform_4(%arg0: i32) -> (i32, i32) {
    %c0_i32 = arith.constant 0 : i32
    %c0_i32_0 = arith.constant 0 : i32
    %c0_i32_1 = arith.constant 0 : i32
    return %c0_i32, %c0_i32_0 : i32, i32
  }
  func.func @transform_5(%arg0: i32) -> (i32, i32) {
    %c0_i32 = arith.constant 0 : i32
    %c0_i32_0 = arith.constant 0 : i32
    %c0_i32_1 = arith.constant 0 : i32
    return %c0_i32, %c0_i32_0 : i32, i32
  }
  func.func @transform_6(%arg0: i32) -> (i32, i32) {
    %c0_i32 = arith.constant 0 : i32
    %c0_i32_0 = arith.constant 0 : i32
    return %arg0, %c0_i32 : i32, i32
  }
}

</mosaic_0001>

<llo_original>
// kernel: tpu_custom_call.1
$region0: #{tpu_custom_call.1}
  #allocation0 [shape = 'u32[]', space=smem, size = 0x4, offset = 0x4, fixed_abs, tag = 'smem constant byte address 0x4 - core index']
  #allocation1 [shape = 'u32[144,128]{1,0:T(1,128)}', space=vmem, size = 0x12000, scoped, tag = 'internal scratch']
  %s0 = inlined_call_operand.vmem [shape: bf16[32,32], index: 0, kind: input, shape index: {}]
  %s1 = inlined_call_operand.vmem [shape: bf16[32,32], index: 1, kind: input, shape index: {}]
  %s2 = inlined_call_operand.vmem [shape: f32[32,8], index: 2, kind: input, shape index: {}]
  %s3 = inlined_call_operand.vmem [shape: f32[32,1], index: 3, kind: input, shape index: {}]
  %s4 = inlined_call_operand.vmem [shape: f32[8,64], index: 4, kind: input, shape index: {}]
  %s5 = inlined_call_operand.vmem [shape: f32[1,64], index: 5, kind: input, shape index: {}]
  %s6 = inlined_call_operand.hbm [shape: bf16[32,32], index: 6, kind: output, shape index: {}]
  %s7 = sld [smem:[#allocation0]]
  $region57: #{tpu_custom_call.1} parent=0
    _
  %s9 = ssub.s32 1, %s7
  %s10 = scalar_select 0, %s9, %s7
  $region1: #{tpu_custom_call.1} parent=0
    #allocation2 [shape = 'u8[8192]{0}', space=vmem, size = 0x2000, scoped, tag = 'output window, operand 0']
    #allocation3 [shape = 's32[2]{0}', space=sflag, size = 0x8, scoped, tag = 'scoped memory for tpu_custom_call.1']
    %11 = vsyncpa [#allocation3], 0
    %s12 = scalar_lea.sflag [#allocation3], 1
    %13 = vsyncpa %s12, 0
    loop: start=0, step=1, limit=4
    $region2: #{tpu_custom_call.1} parent=1 // loop_pre_header
      _
    $region3: #{tpu_custom_call.1} parent=1 // loop_header
      %s15 = sphi 0, %s19
      %p16 = scmp.ge.s32.totalorder %s15, 4
      %s25 = sphi 0, %s27
      %s28 = sphi 0, %s25
      %s29 = sphi 0, %s28
      %s45 = sphi 0, %s29
      %s49 = sphi 0, %s49
      %s51 = sphi 0, %s49
      %s52 = sphi 0, %s51
      %s66 = sphi 0, %s52
      %s72 = sphi 0, %s74
      %s75 = sphi 0, %s72
      %s76 = sphi 0, %s75
      %s92 = sphi 0, %s76
      %s98 = sphi 0, %s100
      %s101 = sphi 0, %s98
      %s102 = sphi 0, %s101
      %s118 = sphi 0, %s102
      %s122 = sphi 0, %s122
      %s124 = sphi 0, %s122
      %s125 = sphi 0, %s124
      %s139 = sphi 0, %s125
      %s143 = sphi 0, %s143
      %s145 = sphi 0, %s143
      %s146 = sphi 0, %s145
      %s160 = sphi 0, %s146
      %s166 = sphi 0, %s168
      %s169 = sphi 0, %s166
      %s170 = sphi 0, %s169
      %s186 = sphi 0, %s170
    $region4: #{tpu_custom_call.1} parent=1 // loop_header_branch
      %18 = sbr.rel (%p16) target = $region8
    $region5: #{tpu_custom_call.1} parent=1 // loop_body
      %s20 = ssub.s32 %s15, 1
      %s21 = ssub.s32 %s15, 2
      %s22 = sadd.s32 %s15, 1
      %s23 = ssub.s32 %s15, %s22
      %p24 = scmp.eq.s32.totalorder %s23, 0
      %s26 = sadd.s32 %s25, 1
      %s27 = scalar_select %p24, %s25, %s26
      %p30 = pneg %p24
      %p31 = scmp.eq.s32.totalorder %s15, 1
      %p32 = por %p30, %p31
      %p33 = scmp.ne.s32.totalorder %s25, %s28
      %p34 = scmp.eq.s32.totalorder %s15, 0
      %p35 = por %p33, %p34
      %p36 = scmp.ne.s32.totalorder %s25, %s28
      %p37 = scmp.eq.s32.totalorder %s20, 1
      %p38 = por %p36, %p37
      %p39 = scmp.ne.s32.totalorder %s28, %s29
      %p40 = scmp.eq.s32.totalorder %s20, 0
      %p41 = por %p39, %p40
      %p42 = scmp.ne.s32.totalorder %s28, %s29
      %p43 = scmp.eq.s32.totalorder %s21, 1
      %p44 = por %p42, %p43
      %p46 = scmp.ne.s32.totalorder %s29, %s45
      %p47 = scmp.eq.s32.totalorder %s21, 0
      %p48 = por %p46, %p47
      %s50 = sadd.s32 %s49, 1
      %p53 = scmp.eq.s32.totalorder %s15, 1
      %p54 = scmp.ne.s32.totalorder %s49, %s51
      %p55 = scmp.eq.s32.totalorder %s15, 0
      %p56 = por %p54, %p55
      %p57 = scmp.ne.s32.totalorder %s49, %s51
      %p58 = scmp.eq.s32.totalorder %s20, 1
      %p59 = por %p57, %p58
      %p60 = scmp.ne.s32.totalorder %s51, %s52
      %p61 = scmp.eq.s32.totalorder %s20, 0
      %p62 = por %p60, %p61
      %p63 = scmp.ne.s32.totalorder %s51, %s52
      %p64 = scmp.eq.s32.totalorder %s21, 1
      %p65 = por %p63, %p64
      %p67 = scmp.ne.s32.totalorder %s52, %s66
      %p68 = scmp.eq.s32.totalorder %s21, 0
      %p69 = por %p67, %p68
      %s70 = ssub.s32 %s15, %s22
      %p71 = scmp.eq.s32.totalorder %s70, 0
      %s73 = sadd.s32 %s72, 1
      %s74 = scalar_select %p71, %s72, %s73
      %p77 = pneg %p71
      %p78 = scmp.eq.s32.totalorder %s15, 1
      %p79 = por %p77, %p78
      %p80 = scmp.ne.s32.totalorder %s72, %s75
      %p81 = scmp.eq.s32.totalorder %s15, 0
      %p82 = por %p80, %p81
      %p83 = scmp.ne.s32.totalorder %s72, %s75
      %p84 = scmp.eq.s32.totalorder %s20, 1
      %p85 = por %p83, %p84
      %p86 = scmp.ne.s32.totalorder %s75, %s76
      %p87 = scmp.eq.s32.totalorder %s20, 0
      %p88 = por %p86, %p87
      %p89 = scmp.ne.s32.totalorder %s75, %s76
      %p90 = scmp.eq.s32.totalorder %s21, 1
      %p91 = por %p89, %p90
      %p93 = scmp.ne.s32.totalorder %s76, %s92
      %p94 = scmp.eq.s32.totalorder %s21, 0
      %p95 = por %p93, %p94
      %s96 = ssub.s32 %s15, %s22
      %p97 = scmp.eq.s32.totalorder %s96, 0
      %s99 = sadd.s32 %s98, 1
      %s100 = scalar_select %p97, %s98, %s99
      %p103 = pneg %p97
      %p104 = scmp.eq.s32.totalorder %s15, 1
      %p105 = por %p103, %p104
      %p106 = scmp.ne.s32.totalorder %s98, %s101
      %p107 = scmp.eq.s32.totalorder %s15, 0
      %p108 = por %p106, %p107
      %p109 = scmp.ne.s32.totalorder %s98, %s101
      %p110 = scmp.eq.s32.totalorder %s20, 1
      %p111 = por %p109, %p110
      %p112 = scmp.ne.s32.totalorder %s101, %s102
      %p113 = scmp.eq.s32.totalorder %s20, 0
      %p114 = por %p112, %p113
      %p115 = scmp.ne.s32.totalorder %s101, %s102
      %p116 = scmp.eq.s32.totalorder %s21, 1
      %p117 = por %p115, %p116
      %p119 = scmp.ne.s32.totalorder %s102, %s118
      %p120 = scmp.eq.s32.totalorder %s21, 0
      %p121 = por %p119, %p120
      %s123 = sadd.s32 %s122, 1
      %p126 = scmp.eq.s32.totalorder %s15, 1
      %p127 = scmp.ne.s32.totalorder %s122, %s124
      %p128 = scmp.eq.s32.totalorder %s15, 0
      %p129 = por %p127, %p128
      %p130 = scmp.ne.s32.totalorder %s122, %s124
      %p131 = scmp.eq.s32.totalorder %s20, 1
      %p132 = por %p130, %p131
      %p133 = scmp.ne.s32.totalorder %s124, %s125
      %p134 = scmp.eq.s32.totalorder %s20, 0
      %p135 = por %p133, %p134
      %p136 = scmp.ne.s32.totalorder %s124, %s125
      %p137 = scmp.eq.s32.totalorder %s21, 1
      %p138 = por %p136, %p137
      %p140 = scmp.ne.s32.totalorder %s125, %s139
      %p141 = scmp.eq.s32.totalorder %s21, 0
      %p142 = por %p140, %p141
      %s144 = sadd.s32 %s143, 1
      %p147 = scmp.eq.s32.totalorder %s15, 1
      %p148 = scmp.ne.s32.totalorder %s143, %s145
      %p149 = scmp.eq.s32.totalorder %s15, 0
      %p150 = por %p148, %p149
      %p151 = scmp.ne.s32.totalorder %s143, %s145
      %p152 = scmp.eq.s32.totalorder %s20, 1
      %p153 = por %p151, %p152
      %p154 = scmp.ne.s32.totalorder %s145, %s146
      %p155 = scmp.eq.s32.totalorder %s20, 0
      %p156 = por %p154, %p155
      %p157 = scmp.ne.s32.totalorder %s145, %s146
      %p158 = scmp.eq.s32.totalorder %s21, 1
      %p159 = por %p157, %p158
      %p161 = scmp.ne.s32.totalorder %s146, %s160
      %p162 = scmp.eq.s32.totalorder %s21, 0
      %p163 = por %p161, %p162
      %s164 = ssub.s32 %s15, %s22
      %p165 = scmp.eq.s32.totalorder %s164, 0
      %s167 = sadd.s32 %s166, 1
      %s168 = scalar_select %p165, %s166, %s167
      %p171 = pneg %p165
      %p172 = scmp.eq.s32.totalorder %s15, 1
      %p173 = por %p171, %p172
      %p174 = scmp.ne.s32.totalorder %s166, %s169
      %p175 = scmp.eq.s32.totalorder %s15, 0
      %p176 = por %p174, %p175
      %p177 = scmp.ne.s32.totalorder %s166, %s169
      %p178 = scmp.eq.s32.totalorder %s20, 1
      %p179 = por %p177, %p178
      %p180 = scmp.ne.s32.totalorder %s169, %s170
      %p181 = scmp.eq.s32.totalorder %s20, 0
      %p182 = por %p180, %p181
      %p183 = scmp.ne.s32.totalorder %s169, %s170
      %p184 = scmp.eq.s32.totalorder %s21, 1
      %p185 = por %p183, %p184
      %p187 = scmp.ne.s32.totalorder %s170, %s186
      %p188 = scmp.eq.s32.totalorder %s21, 0
      %p189 = por %p187, %p188
      %p190 = scmp.le.s32.totalorder 1, %s15
      %p191 = scmp.lt.s32.totalorder %s15, 3
      %p192 = pnand %p190, %p191
      %p193 = pneg %p192
      // Predicated region
      $region9: #{tpu_custom_call.1} parent=5 // pred_check
        _
      $region10: #{tpu_custom_call.1} parent=5 // pred_check_branch
        %195 = sbr.rel (%p192) target = $region12
      $region11: #{tpu_custom_call.1} parent=5 // pred_region
        %s196 = ssub.s32 %s15, 1
        // Predicated region
        $region13: #{tpu_custom_call.1} parent=11 // pred_check
          %p197 = pneg %p62
        $region14: #{tpu_custom_call.1} parent=11 // pred_check_branch
          %199 = sbr.rel (%p197) target = $region16
        $region15: #{tpu_custom_call.1} parent=11 // pred_region
          _
        $region16: #{tpu_custom_call.1} parent=11 // pred_fallthru
          _
        // Predicated region
        $region17: #{tpu_custom_call.1} parent=11 // pred_check
          %p200 = pneg %p135
        $region18: #{tpu_custom_call.1} parent=11 // pred_check_branch
          %202 = sbr.rel (%p200) target = $region20
        $region19: #{tpu_custom_call.1} parent=11 // pred_region
          _
        $region20: #{tpu_custom_call.1} parent=11 // pred_fallthru
          _
        // Predicated region
        $region21: #{tpu_custom_call.1} parent=11 // pred_check
          %p203 = pneg %p156
        $region22: #{tpu_custom_call.1} parent=11 // pred_check_branch
          %205 = sbr.rel (%p203) target = $region24
        $region23: #{tpu_custom_call.1} parent=11 // pred_region
          _
        $region24: #{tpu_custom_call.1} parent=11 // pred_fallthru
          _
      $region12: #{tpu_custom_call.1} parent=5 // pred_fallthru
        _
      %p206 = scmp.lt.s32.totalorder %s15, 2
      // Predicated region
      $region25: #{tpu_custom_call.1} parent=5 // pred_check
        %p207 = pneg %p206
      $region26: #{tpu_custom_call.1} parent=5 // pred_check_branch
        %209 = sbr.rel (%p207) target = $region28
      $region27: #{tpu_custom_call.1} parent=5 // pred_region
        // Predicated region
        $region29: #{tpu_custom_call.1} parent=27 // pred_check
          %p210 = pneg %p35
        $region30: #{tpu_custom_call.1} parent=27 // pred_check_branch
          %212 = sbr.rel (%p210) target = $region32
        $region31: #{tpu_custom_call.1} parent=27 // pred_region
          %s213 = smul.u32 2, %s15
          %p214 = scmp.lt.s32.totalorder %s213, 3
          %s215 = scalar_select %p214, %s213, 3
          %s216 = smul.addr %s215, 4
          %s217 = scalar_lea.vmem %s0, %s216
          %s218 = smul.u32 2, %s15
        $region32: #{tpu_custom_call.1} parent=27 // pred_fallthru
          _
        // Predicated region
        $region33: #{tpu_custom_call.1} parent=27 // pred_check
          %p219 = pneg %p82
        $region34: #{tpu_custom_call.1} parent=27 // pred_check_branch
          %221 = sbr.rel (%p219) target = $region36
        $region35: #{tpu_custom_call.1} parent=27 // pred_region
          %s222 = smul.u32 2, %s15
          %p223 = scmp.lt.s32.totalorder %s222, 3
          %s224 = scalar_select %p223, %s222, 3
          %s225 = smul.addr %s224, 8
          %s226 = scalar_lea.vmem %s2, %s225
          %s227 = smul.u32 2, %s15
        $region36: #{tpu_custom_call.1} parent=27 // pred_fallthru
          _
        // Predicated region
        $region37: #{tpu_custom_call.1} parent=27 // pred_check
          %p228 = pneg %p108
        $region38: #{tpu_custom_call.1} parent=27 // pred_check_branch
          %230 = sbr.rel (%p228) target = $region40
        $region39: #{tpu_custom_call.1} parent=27 // pred_region
          %s231 = smul.u32 2, %s15
          %p232 = scmp.lt.s32.totalorder %s231, 3
          %s233 = scalar_select %p232, %s231, 3
          %s234 = smul.addr %s233, 8
          %s235 = scalar_lea.vmem %s3, %s234
          %s236 = smul.u32 2, %s15
        $region40: #{tpu_custom_call.1} parent=27 // pred_fallthru
          _
      $region28: #{tpu_custom_call.1} parent=5 // pred_fallthru
        _
      %p237 = scmp.le.s32.totalorder 1, %s15
      %p238 = scmp.lt.s32.totalorder %s15, 3
      %p239 = pnand %p237, %p238
      %p240 = pneg %p239
      // Predicated region
      $region41: #{tpu_custom_call.1} parent=5 // pred_check
        _
      $region42: #{tpu_custom_call.1} parent=5 // pred_check_branch
        %242 = sbr.rel (%p239) target = $region44
      $region43: #{tpu_custom_call.1} parent=5 // pred_region
        %s243 = ssub.s32 %s15, 1
        %s244 = smul.u32 2, %s20
        %p245 = scmp.lt.s32.totalorder %s244, 3
        %s246 = scalar_select %p245, %s244, 3
        %s247 = smul.addr %s246, 4
        %s248 = scalar_lea.vmem %s0, %s247
        %p249 = pneg %p41
        %p250 = pneg %p38
        %p251 = pneg %p62
        %p252 = pneg %p59
        %s253 = smul.u32 2, %s20
        %p254 = scmp.lt.s32.totalorder %s253, 3
        %s255 = scalar_select %p254, %s253, 3
        %s256 = smul.addr %s255, 8
        %s257 = scalar_lea.vmem %s2, %s256
        %p258 = pneg %p88
        %p259 = pneg %p85
        %s260 = smul.u32 2, %s20
        %p261 = scmp.lt.s32.totalorder %s260, 3
        %s262 = scalar_select %p261, %s260, 3
        %s263 = smul.addr %s262, 8
        %s264 = scalar_lea.vmem %s3, %s263
        %p265 = pneg %p114
        %p266 = pneg %p111
        %p267 = pneg %p135
        %p268 = pneg %p132
        %p269 = pneg %p156
        %p270 = pneg %p153
        %p271 = pneg %p182
        %p272 = pneg %p179
        %s273 = sand.u32 %s169, 1
        %s274 = scalar_lea.sflag [#allocation3], %s273
        %s275 = sand.u32 %s169, 1
        %s276 = smul.addr %s275, 8
        %s277 = scalar_lea.vmem [#allocation2], %s276
        %s278 = smul.u32 2, %s20
        %p279 = scmp.lt.s32.totalorder %s278, 3
        %s280 = scalar_select %p279, %s278, 3
        %s281 = smul.addr %s280, 4
        %s282 = scalar_lea.vmem %s0, %s281
        %s283 = smul.u32 2, %s20
        %s284 = smul.u32 2, %s20
        %p285 = scmp.lt.s32.totalorder %s284, 3
        %s286 = scalar_select %p285, %s284, 3
        %s287 = smul.addr %s286, 8
        %s288 = scalar_lea.vmem %s2, %s287
        %s289 = smul.u32 2, %s20
        %s290 = smul.u32 2, %s20
        %p291 = scmp.lt.s32.totalorder %s290, 3
        %s292 = scalar_select %p291, %s290, 3
        %s293 = smul.addr %s292, 8
        %s294 = scalar_lea.vmem %s3, %s293
        %s295 = smul.u32 2, %s20
        %s296 = smul.u32 2, %s20
        %v298 = vld [vmem:[%s282] sm:$0xf]
        %v299 = vld [vmem:[%s282 + $0x4] sm:$0xf]
        %v300 = vld [vmem:[%s1] sm:$0xf]
        %v301 = vld [vmem:[%s1 + $0x4] sm:$0xf]
        %v302 = vld [vmem:[%s1 + $0x8] sm:$0xf]
        %v303 = vld [vmem:[%s1 + $0xc] sm:$0xf]
        %v306 = vunpack.c.l.b16 %v298
        %v307 = vunpack.c.l.b16 %v299
        %v308 = vpack.c.b16 %v307, %v306
        %v313 = vunpack.c.l.b16 %v300
        %v314 = vunpack.c.l.b16 %v301
        %v315 = vunpack.c.l.b16 %v302
        %v316 = vunpack.c.l.b16 %v303
        %v317 = vpack.c.b16 %v314, %v313
        %v318 = vpack.c.b16 %v316, %v315
        %vm321 = vcmask 261120
        %v323 = vsel %vm321, %v308, 0
        %325 = vmatprep.subr.bf16.mxu0 0
        %326 = vmatpush1.bf16.msra.mxu0 0
        %327 = vmatprep.subr.bf16.mxu0 0
        %328 = vmatpush1.bf16.msra.mxu0 0
        %329 = vmatprep.subr.bf16.mxu0 0
        %330 = vmatpush1.bf16.msra.mxu0 0
        %331 = vmatprep.subr.bf16.mxu0 0
        %332 = vmatpush1.bf16.msra.mxu0 0
        %333 = vmatprep.subr.bf16.mxu0 0
        %334 = vmatpush1.bf16.msra.mxu0 0
        %335 = vmatprep.subr.bf16.mxu0 0
        %336 = vmatpush1.bf16.msra.mxu0 0
        %337 = vmatprep.subr.bf16.mxu0 0
        %338 = vmatpush1.bf16.msra.mxu0 %v318
        %339 = vmatprep.subr.bf16.mxu0 0
        %340 = vmatpush1.bf16.msra.mxu0 %v317
        %341 = vmatprep.subr.bf16.mxu0 0
        %342 = vmatpush2.bf16.msra.mxu0 0
        %343 = vmatprep.subr.bf16.mxu0 0
        %344 = vmatpush2.bf16.msra.mxu0 0
        %345 = vmatprep.subr.bf16.mxu0 0
        %346 = vmatpush2.bf16.msra.mxu0 0
        %347 = vmatprep.subr.bf16.mxu0 0
        %348 = vmatpush2.bf16.msra.mxu0 0
        %349 = vmatprep.subr.bf16.mxu0 0
        %350 = vmatpush2.bf16.msra.mxu0 0
        %351 = vmatprep.subr.bf16.mxu0 0
        %352 = vmatpush2.bf16.msra.mxu0 0
        %353 = vmatprep.subr.bf16.mxu0 0
        %354 = vmatpush2.bf16.msra.mxu0 0
        %355 = vmatprep.subr.bf16.mxu0 0
        %356 = vmatpush2.bf16.msra.mxu0 0
        %357 = vmatprep.mubr.bf16.mxu0 0
        %358 = vmatmul.mubr.bf16.gmra.mxu0 %v323
        %v359 = vpop.f32.mrf.mxu0
        %v360 = vadd.f32 0.0, %v359
        %v361 = vpop.f32.mrf.mxu0
        %v362 = vpop.f32.mrf.mxu0
        %v363 = vadd.f32 0.0, %v362
        %v364 = vpop.f32.mrf.mxu0
        %365 = vdwg.mxu0
        %v366 = vld [vmem:[%s288] sm:$0xff]
        %v367 = vld [vmem:[%s288 + $0x8] sm:$0xff]
        %v368 = vld [vmem:[%s4] sm:$0xff]
        %v369 = vld [vmem:[%s5] sm:$0x1]
        %v371 = vlaneseq
        %v372 = vshrl.u32 %v371, 7
        %v373 = vsub.s32 0, %v372
        %v374 = vrot.slane %v369, %v373
        %vm376 = vcmask 64512
        %v378 = vsel %vm376, %v366, 0
        %v381 = vsel %vm376, %v367, 0
        %383 = vmatprep.subr.mxu0 0.0
        %384 = vmatpush1.msra.mxu0 0.0
        %385 = vmatprep.subr.mxu0 0.0
        %386 = vmatpush1.msra.mxu0 0.0
        %387 = vmatprep.subr.mxu0 0.0
        %388 = vmatpush1.msra.mxu0 0.0
        %389 = vmatprep.subr.mxu0 0.0
        %390 = vmatpush1.msra.mxu0 0.0
        %391 = vmatprep.subr.mxu0 0.0
        %392 = vmatpush1.msra.mxu0 0.0
        %393 = vmatprep.subr.mxu0 0.0
        %394 = vmatpush1.msra.mxu0 0.0
        %395 = vmatprep.subr.mxu0 0.0
        %396 = vmatpush1.msra.mxu0 0.0
        %397 = vmatprep.subr.mxu0 0.0
        %398 = vmatpush1.msra.mxu0 0.0
        %399 = vmatprep.subr.mxu0 0.0
        %400 = vmatpush1.msra.mxu0 0.0
        %401 = vmatprep.subr.mxu0 0.0
        %402 = vmatpush1.msra.mxu0 0.0
        %403 = vmatprep.subr.mxu0 0.0
        %404 = vmatpush1.msra.mxu0 0.0
        %405 = vmatprep.subr.mxu0 0.0
        %406 = vmatpush1.msra.mxu0 0.0
        %407 = vmatprep.subr.mxu0 0.0
        %408 = vmatpush1.msra.mxu0 0.0
        %409 = vmatprep.subr.mxu0 0.0
        %410 = vmatpush1.msra.mxu0 0.0
        %411 = vmatprep.subr.mxu0 0.0
        %412 = vmatpush1.msra.mxu0 0.0
        %413 = vmatprep.subr.mxu0 0.0
        %414 = vmatpush1.msra.mxu0 %v368
        %415 = vmatprep.subr.mxu0 0.0
        %416 = vmatpush2.msra.mxu0 0.0
        %417 = vmatprep.subr.mxu0 0.0
        %418 = vmatpush2.msra.mxu0 0.0
        %419 = vmatprep.subr.mxu0 0.0
        %420 = vmatpush2.msra.mxu0 0.0
        %421 = vmatprep.subr.mxu0 0.0
        %422 = vmatpush2.msra.mxu0 0.0
        %423 = vmatprep.subr.mxu0 0.0
        %424 = vmatpush2.msra.mxu0 0.0
        %425 = vmatprep.subr.mxu0 0.0
        %426 = vmatpush2.msra.mxu0 0.0
        %427 = vmatprep.subr.mxu0 0.0
        %428 = vmatpush2.msra.mxu0 0.0
        %429 = vmatprep.subr.mxu0 0.0
        %430 = vmatpush2.msra.mxu0 0.0
        %431 = vmatprep.subr.mxu0 0.0
        %432 = vmatpush2.msra.mxu0 0.0
        %433 = vmatprep.subr.mxu0 0.0
        %434 = vmatpush2.msra.mxu0 0.0
        %435 = vmatprep.subr.mxu0 0.0
        %436 = vmatpush2.msra.mxu0 0.0
        %437 = vmatprep.subr.mxu0 0.0
        %438 = vmatpush2.msra.mxu0 0.0
        %439 = vmatprep.subr.mxu0 0.0
        %440 = vmatpush2.msra.mxu0 0.0
        %441 = vmatprep.subr.mxu0 0.0
        %442 = vmatpush2.msra.mxu0 0.0
        %443 = vmatprep.subr.mxu0 0.0
        %444 = vmatpush2.msra.mxu0 0.0
        %445 = vmatprep.subr.mxu0 0.0
        %446 = vmatpush2.msra.mxu0 0.0
        %447 = vmatprep.mubr.f32.mxu0 0.0
        %448 = vmatmul.mubr.f32.gmra.mxu0 %v378
        %v449 = vpop.f32.mrf.mxu0
        %v450 = vadd.f32 %v374, %v449
        %v451 = vpop.f32.mrf.mxu0
        %452 = vmatprep.mubr.f32.mxu0 0.0
        %453 = vmatmul.mubr.f32.gmra.mxu0 %v381
        %v454 = vpop.f32.mrf.mxu0
        %v455 = vadd.f32 %v374, %v454
        %v456 = vpop.f32.mrf.mxu0
        %457 = vdwg.mxu0
        %v458 = vld [vmem:[%s294] sm:$0xff]
        %v459 = vld [vmem:[%s294 + $0x8] sm:$0xff]
        %461 = vset.pattern.permute.xlu0 0
        %462 = vperm.xlu0 %461, %v458
        %v463 = vpop.permute.xlu0 %462
        %466 = vset.pattern.permute.xlu0 0
        %467 = vperm.xlu0 %466, %v459
        %v468 = vpop.permute.xlu0 %467
        %v470 = vmul.f32 %v463, %v450
        %v471 = vmul.f32 %v468, %v455
        %v472 = vsub.f32 %v360, %v470
        %v473 = vsub.f32 %v363, %v471
        %476 = vrot.lane.b32.xlu0 %v450, 96
        %v477 = vpop.permute.xlu0 %476
        %478 = vrot.lane.b32.xlu0 %v455, 96
        %v479 = vpop.permute.xlu0 %478
        %v482 = vadd.f32 %v472, %v477
        %v483 = vadd.f32 %v473, %v479
        %v484 = vmax.f32 %v482, 0.0
        %v485 = vmax.f32 %v483, 0.0
        %v486 = vpack.c.bf16 %v485, %v484
        %v488 = vunpack.c.l.b16 %v486
        %v489 = vunpack.c.h.b16 %v486
        %v490 = vpack.c.b16 %v488, %v488
        %v491 = vpack.c.b16 %v489, %v489
        %vm494 = vcmask 257024
        %495 = vst.msk [vmem:[%s277] sm:$0xf] %vm494, %v490
        %496 = vst.msk [vmem:[%s277 + $0x4] sm:$0xf] %vm494, %v491
        %s497 = sand.u32 %s169, 1
        %s498 = scalar_lea.sflag [#allocation3], %s497
        %s499 = sand.u32 %s169, 1
        %s500 = smul.addr %s499, 8
        %s501 = scalar_lea.vmem [#allocation2], %s500
        // Predicated region
        $region45: #{tpu_custom_call.1} parent=43 // pred_check
          %p502 = pneg %p179
        $region46: #{tpu_custom_call.1} parent=43 // pred_check_branch
          %504 = sbr.rel (%p502) target = $region48
        $region47: #{tpu_custom_call.1} parent=43 // pred_region
          %s505 = smul.u32 2, %s20
          %s507 = ssub.s32 128, 128
          %508 = vsyncadd %s498, %s507
          %s509 = smul.addr %s505, 64
          %s510 = scalar_lea.hbm %s6, %s509
          %s511 = sshll.u32 %s501, 4
          %s512 = int_to_ptr.vmem [resolvable:$true] %s511
          %517 = dma.vmem_to_hbm [thread:$0]  %s512, 128, %s510, %s498, 64, 64, 4
        $region48: #{tpu_custom_call.1} parent=43 // pred_fallthru
          _
      $region44: #{tpu_custom_call.1} parent=5 // pred_fallthru
        _
      %p518 = scmp.le.s32.totalorder 2, %s15
      // Predicated region
      $region49: #{tpu_custom_call.1} parent=5 // pred_check
        %p519 = pneg %p518
      $region50: #{tpu_custom_call.1} parent=5 // pred_check_branch
        %521 = sbr.rel (%p519) target = $region52
      $region51: #{tpu_custom_call.1} parent=5 // pred_region
        %s522 = ssub.s32 %s15, 2
        // Predicated region
        $region53: #{tpu_custom_call.1} parent=51 // pred_check
          %p523 = pneg %p185
        $region54: #{tpu_custom_call.1} parent=51 // pred_check_branch
          %525 = sbr.rel (%p523) target = $region56
        $region55: #{tpu_custom_call.1} parent=51 // pred_region
          %s526 = sand.u32 %s170, 1
          %s527 = scalar_lea.sflag [#allocation3], %s526
          %s528 = sand.u32 %s170, 1
          %s529 = smul.addr %s528, 8
          %s530 = scalar_lea.vmem [#allocation2], %s529
          %531 = dma.done %s527, 128
        $region56: #{tpu_custom_call.1} parent=51 // pred_fallthru
          _
      $region52: #{tpu_custom_call.1} parent=5 // pred_fallthru
        _
    $region6: #{tpu_custom_call.1} parent=1 // loop_footer
      %s19 = sadd.s32 1, %s15
    $region7: #{tpu_custom_call.1} parent=1 // loop_footer_branch
      %14 = sbr.rel target = $region3
    $region8: #{tpu_custom_call.1} parent=1 // loop_exit
      _
    %532 = vsyncpa [#allocation3], 1
    %s533 = scalar_lea.sflag [#allocation3], 1
    %534 = vsyncpa %s533, 1

</llo_original>
